<compile_context>
chip_gen: v6e
topology: v6e:2x2x1
jax: 0.10.0
libtpu: 0.0.40
codegen_flags: <defaults>
</compile_context>

<pallas_src>
import jax
import jax.numpy as jnp
from jax.experimental import pallas as pl
from jax.experimental.pallas import tpu as pltpu

EPSILON = 0.1


def _make_kernel(num_classes, epsilon):
    eps_over_c = float(epsilon) / float(num_classes)
    w_target = float(1.0 - epsilon) + eps_over_c  # weight on the true class

    def kernel(out_ref, tgt_ref, loss_ref):
        # out_ref : (TB, C) logits (f32 or bf16)
        # tgt_ref : (TB, 1) int32 class indices
        # loss_ref: (TB, 1) f32 per-sample smoothed CE loss
        x = out_ref[...].astype(jnp.float32)
        tb, c = x.shape

        # Numerically stable per-row logsumexp (exp/log -> EUP, reduces -> XLU).
        m = jnp.max(x, axis=1, keepdims=True)                            # (TB, 1)
        lse = m + jnp.log(jnp.sum(jnp.exp(x - m), axis=1, keepdims=True))

        # Smoothing weights sum to 1, so:
        #   loss = -sum_c w_c * (x_c - LSE) = LSE - sum_c w_c * x_c
        class_ids = jax.lax.broadcasted_iota(jnp.int32, (tb, c), 1)
        w = jnp.where(tgt_ref[...] == class_ids, w_target, eps_over_c)   # (TB, C)
        wx = jnp.sum(w * x, axis=1, keepdims=True)                       # (TB, 1)

        loss_ref[...] = lse - wx

    return kernel


def _choose_tile_rows(batch, num_classes, itemsize):
    """Largest batch tile with one logit block <= ~4 MiB (<= ~8 MiB when
    double-buffered, safe under v5e's 16 MiB default scoped VMEM), rounded to
    a sublane multiple of 8, capped at 2048 rows."""
    target_bytes = 4 * 1024 * 1024
    tb = target_bytes // max(1, num_classes * itemsize)
    tb = min(2048, max(8, (tb // 8) * 8))
    if batch <= tb:
        return batch        # single tile: block dim == full dim is always legal
    return tb


def cross_entropy(outputs, targets, *, epsilon=EPSILON, reduction=True,
                  tile_rows=None):
    """outputs: [B, C] float (f32 or bf16); targets: [B] int class indices.

    reduction=True  -> scalar mean loss (PyTorch module default)
    reduction=False -> per-sample loss vector [B]
    """
    B, C = outputs.shape
    tgt2d = targets.astype(jnp.int32).reshape(B, 1)

    itemsize = jnp.dtype(outputs.dtype).itemsize
    TB = tile_rows if tile_rows is not None else _choose_tile_rows(B, C, itemsize)
    num_tiles = pl.cdiv(B, TB)   # ragged edge handled by Pallas block masking

    per_sample = pl.pallas_call(
        _make_kernel(C, epsilon),
        out_shape=jax.ShapeDtypeStruct((B, 1), jnp.float32),
        grid=(num_tiles,),
        in_specs=[
            pl.BlockSpec((TB, C), lambda i: (i, 0)),
            pl.BlockSpec((TB, 1), lambda i: (i, 0)),
        ],
        out_specs=pl.BlockSpec((TB, 1), lambda i: (i, 0)),
        compiler_params=pltpu.CompilerParams(
            dimension_semantics=("parallel",)),
    )(outputs, tgt2d)

    per_sample = per_sample[:, 0]
    if reduction:
        return jnp.mean(per_sample)
    return per_sample


def _reference(outputs, targets, num_classes, epsilon=EPSILON, reduction=True):
    log_probs = jax.nn.log_softmax(outputs.astype(jnp.float32), axis=1)
    one_hot = jax.nn.one_hot(targets, num_classes, dtype=jnp.float32)
    smoothed = (1.0 - epsilon) * one_hot + epsilon / num_classes
    loss = jnp.sum(-smoothed * log_probs, axis=1)
    return jnp.mean(loss) if reduction else loss


if __name__ == "__main__":
    key = jax.random.PRNGKey(0)
    k1, k2, k3, k4, k5, k6 = jax.random.split(key, 6)

    # Test 1: module-default shapes (batch=8, num_label=10), reduction=True.
    batch, num_label = 8, 10
    outputs = jax.random.normal(k1, (batch, num_label), dtype=jnp.float32)
    targets = jax.random.randint(k2, (batch,), 0, num_label, dtype=jnp.int32)

    loss = cross_entropy(outputs, targets)
    jax.block_until_ready(loss)
    ref = _reference(outputs, targets, num_label)
    assert jnp.allclose(loss, ref, atol=1e-5, rtol=1e-5), (loss, ref)

    # Test 2: multi-tile grid with a ragged last tile (20 rows, TB=8 -> 3 tiles)
    # and reduction=False.
    batch2, num_label2 = 20, 16
    outputs2 = jax.random.normal(k3, (batch2, num_label2), dtype=jnp.float32)
    targets2 = jax.random.randint(k4, (batch2,), 0, num_label2, dtype=jnp.int32)

    per_sample = cross_entropy(outputs2, targets2, reduction=False, tile_rows=8)
    jax.block_until_ready(per_sample)
    ref2 = _reference(outputs2, targets2, num_label2, reduction=False)
    assert per_sample.shape == (batch2,)
    assert jnp.allclose(per_sample, ref2, atol=1e-5, rtol=1e-5), (per_sample, ref2)

    # Test 3: bf16 logits path (kernel computes in f32).
    batch3, num_label3 = 16, 12
    outputs3 = jax.random.normal(k5, (batch3, num_label3),
                                 dtype=jnp.float32).astype(jnp.bfloat16)
    targets3 = jax.random.randint(k6, (batch3,), 0, num_label3, dtype=jnp.int32)

    loss3 = cross_entropy(outputs3, targets3)
    jax.block_until_ready(loss3)
    ref3 = _reference(outputs3.astype(jnp.float32), targets3, num_label3)
    assert jnp.allclose(loss3, ref3, atol=1e-5, rtol=1e-5), (loss3, ref3)

    print("KERNEL_OK")
</pallas_src>

<mosaic_0001>
module attributes {stable_mosaic.version = 11 : i64} {
  func.func @kernel(%arg0: i32, %arg1: memref<8x10xf32, #tpu.memory_space<vmem>>, %arg2: memref<8x1xi32, #tpu.memory_space<vmem>>, %arg3: memref<8x1xf32, #tpu.memory_space<vmem>>) attributes {dimension_semantics = [#tpu.dimension_semantics<parallel>], iteration_bounds = array<i64: 1>, scalar_prefetch = 0 : i64, scratch_operands = 0 : i64, tpu.core_type = #tpu.core_type<tc>, window_params = [{transform_indices = @transform_0, window_bounds = array<i64: 8, 10>}, {transform_indices = @transform_1, window_bounds = array<i64: 8, 1>}, {transform_indices = @transform_2, window_bounds = array<i64: 8, 1>}]} {
    %c0 = arith.constant 0 : index
    %c0_0 = arith.constant 0 : index
    %0 = vector.load %arg1[%c0, %c0_0] : memref<8x10xf32, #tpu.memory_space<vmem>>, vector<8x10xf32>
    %cst = arith.constant dense<0xFF800000> : vector<8xf32>
    %1 = vector.multi_reduction <maximumf>, %0, %cst [1] : vector<8x10xf32> to vector<8xf32>
    %2 = vector.shape_cast %1 : vector<8xf32> to vector<8x1xf32>
    %3 = vector.broadcast %2 : vector<8x1xf32> to vector<8x10xf32>
    %4 = arith.subf %0, %3 : vector<8x10xf32>
    %5 = math.exp %4 : vector<8x10xf32>
    %cst_1 = arith.constant dense<0.000000e+00> : vector<8xf32>
    %6 = vector.multi_reduction <add>, %5, %cst_1 [1] : vector<8x10xf32> to vector<8xf32>
    %7 = vector.shape_cast %6 : vector<8xf32> to vector<8x1xf32>
    %8 = math.log %7 : vector<8x1xf32>
    %9 = arith.addf %2, %8 : vector<8x1xf32>
    %10 = tpu.iota {dimensions = array<i32: 1>} : vector<8x10xi32>
    %c0_2 = arith.constant 0 : index
    %c0_3 = arith.constant 0 : index
    %11 = vector.load %arg2[%c0_2, %c0_3] : memref<8x1xi32, #tpu.memory_space<vmem>>, vector<8x1xi32>
    %12 = vector.broadcast %11 : vector<8x1xi32> to vector<8x10xi32>
    %13 = arith.cmpi eq, %12, %10 : vector<8x10xi32>
    %cst_4 = arith.constant 9.100000e-01 : f32
    %cst_5 = arith.constant 0.00999999977 : f32
    %14 = vector.broadcast %cst_4 : f32 to vector<8x10xf32>
    %15 = vector.broadcast %cst_5 : f32 to vector<8x10xf32>
    %16 = arith.select %13, %14, %15 : vector<8x10xi1>, vector<8x10xf32>
    %17 = arith.mulf %16, %0 : vector<8x10xf32>
    %cst_6 = arith.constant dense<0.000000e+00> : vector<8xf32>
    %18 = vector.multi_reduction <add>, %17, %cst_6 [1] : vector<8x10xf32> to vector<8xf32>
    %19 = vector.shape_cast %18 : vector<8xf32> to vector<8x1xf32>
    %20 = arith.subf %9, %19 : vector<8x1xf32>
    %c0_7 = arith.constant 0 : index
    %c0_8 = arith.constant 0 : index
    %21 = vector.load %arg3[%c0_7, %c0_8] : memref<8x1xf32, #tpu.memory_space<vmem>>, vector<8x1xf32>
    tpu.vector_store %arg3[%c0_7, %c0_8], %20 {strides = array<i32>} : memref<8x1xf32, #tpu.memory_space<vmem>>, vector<8x1xf32>,
    return
  }
  func.func @transform_0(%arg0: i32) -> (i32, i32) {
    %c0_i32 = arith.constant 0 : i32
    %c0_i32_0 = arith.constant 0 : i32
    return %arg0, %c0_i32 : i32, i32
  }
  func.func @transform_1(%arg0: i32) -> (i32, i32) {
    %c0_i32 = arith.constant 0 : i32
    %c0_i32_0 = arith.constant 0 : i32
    return %arg0, %c0_i32 : i32, i32
  }
  func.func @transform_2(%arg0: i32) -> (i32, i32) {
    %c0_i32 = arith.constant 0 : i32
    %c0_i32_0 = arith.constant 0 : i32
    return %arg0, %c0_i32 : i32, i32
  }
}

</mosaic_0001>

<llo_original>
// kernel: tpu_custom_call.1
$region0: #{tpu_custom_call.1}
  #allocation0 [shape = 'u32[]', space=smem, size = 0x4, offset = 0x4, fixed_abs, tag = 'smem constant byte address 0x4 - core index']
  #allocation1 [shape = 'u32[144,128]{1,0:T(1,128)}', space=vmem, size = 0x12000, scoped, tag = 'internal scratch']
  %s0 = inlined_call_operand.vmem [shape: f32[8,10], index: 0, kind: input, shape index: {}]
  %s1 = inlined_call_operand.vmem [shape: s32[8,1], index: 1, kind: input, shape index: {}]
  %s2 = inlined_call_operand.vmem [shape: f32[8,1], index: 2, kind: output, shape index: {}]
  %s3 = sld [smem:[#allocation0]]
  $region18: #{tpu_custom_call.1} parent=0
    _
  %s5 = ssub.s32 1, %s3
  %s6 = scalar_select 0, %s5, %s3
  // Predicated region
  $region2: #{tpu_custom_call.1} parent=0 // pred_check
    _
  $region3: #{tpu_custom_call.1} parent=0 // pred_check_branch
    %8 = sbr.rel (0) target = $region5
  $region4: #{tpu_custom_call.1} parent=0 // pred_region
    _
  $region5: #{tpu_custom_call.1} parent=0 // pred_fallthru
    _
  // Predicated region
  $region6: #{tpu_custom_call.1} parent=0 // pred_check
    _
  $region7: #{tpu_custom_call.1} parent=0 // pred_check_branch
    %10 = sbr.rel (0) target = $region9
  $region8: #{tpu_custom_call.1} parent=0 // pred_region
    _
  $region9: #{tpu_custom_call.1} parent=0 // pred_fallthru
    _
  %v11 = vld [vmem:[%s0] sm:$0xff]
  %vm12 = vcmask 80896
  %v13 = vsel %vm12, %v11, -inf
  %14 = vmax.xlane.f32.xlu0 %v13
  %v15 = vpop.xlane.xlu0 %14
  %v16 = vsub.f32 %v11, %v15
  %v17 = vmul.f32 %v16, 1.442695
  %v18 = vpow.pop %v17
  %v19 = vsel %vm12, %v18, 0.0
  %20 = vadd.xlane.f32.xlu0 %v19
  %v21 = vpop.xlane.xlu0 %20
  %v22 = vlog2.pop %v21
  %v23 = vmul.f32 %v22, 0.6931472
  %v24 = vadd.f32 %v15, %v23
  %v25 = vlaneseq
  %v26 = vand.u32 %v25, 127
  %v27 = vld [vmem:[%s1] sm:$0xff]
  %28 = vset.pattern.permute.xlu0 0
  %29 = vperm.xlu0 %28, %v27
  %v30 = vpop.permute.xlu0 %29
  %vm31 = vcmp.eq.s32.totalorder %v30, %v26
  %v32 = vsel %vm31, 0.91, 0.01
  %v33 = vmul.f32 %v32, %v11
  %v34 = vsel %vm12, %v33, 0.0
  %35 = vadd.xlane.f32.xlu0 %v34
  %v36 = vpop.xlane.xlu0 %35
  %v37 = vsub.f32 %v24, %v36
  %vm38 = vcmask 7168
  %39 = vst.msk [vmem:[%s2] sm:$0xff] %vm38, %v37
  // Predicated region
  $region10: #{tpu_custom_call.1} parent=0 // pred_check
    _
  $region11: #{tpu_custom_call.1} parent=0 // pred_check_branch
    %41 = sbr.rel (0) target = $region13
  $region12: #{tpu_custom_call.1} parent=0 // pred_region
    _
  $region13: #{tpu_custom_call.1} parent=0 // pred_fallthru
    _
  // Predicated region
  $region14: #{tpu_custom_call.1} parent=0 // pred_check
    _
  $region15: #{tpu_custom_call.1} parent=0 // pred_check_branch
    %43 = sbr.rel (0) target = $region17
  $region16: #{tpu_custom_call.1} parent=0 // pred_region
    _
  $region17: #{tpu_custom_call.1} parent=0 // pred_fallthru
    _

</llo_original>
